<compile_context>
chip_gen: v7x
topology: tpu7x:2x2x1
jax: 0.10.0
libtpu: 0.0.40
codegen_flags: <defaults>
</compile_context>

<pallas_src>
import jax
import jax.numpy as jnp
from jax.experimental import pallas as pl
from jax.experimental.pallas import tpu as pltpu

BN_EPS = 1e-5        # torch.nn.BatchNorm1d default eps
NEG_BIG = -1e30      # effectively -inf for masking padded class lanes in log_softmax
LANE = 128           # TPU lane width; feature / concat / class dims padded to this


# --------------------------- shared forward math -----------------------------
def incep_math(a, x_pad, w_slab, bias, cfg):
    """IncepGCN forward on values.

    a:      (N, N)        bf16 normalized adjacency.
    x_pad:  (N, 128)      bf16 features, zero-padded beyond in_dim.
    w_slab: (G, 128, 128) bf16 packed BN-folded weights -- a Pallas Ref inside
            the kernel or a jnp array in the precision-matched reference; only
            indexed as w_slab[g] with a static g.
    bias:   (G_pad, 128)  f32 packed BN-folded biases (value).
    Returns (N, 128) f32 log-probs (padded class lanes hold ~NEG_BIG).
    """
    f32, bf16 = jnp.float32, jnp.bfloat16
    hidden = cfg["hidden"]
    nl, nb = cfg["num_layers"], cfg["num_branches"]
    out_dim = cfg["out_dim"]
    n = a.shape[0]

    def mm(lhs, rhs):                      # bf16 MXU matmul, f32 accumulation
        return jnp.dot(lhs, rhs, preferred_element_type=f32)

    def layer(ah, g):                      # (A H) @ W'_g + b'_g  (f32 pre-activation)
        return mm(ah.astype(bf16), w_slab[g]) + bias[g:g + 1, :]

    lane = jax.lax.broadcasted_iota(jnp.int32, (n, LANE), 1)

    # ---- in_layer: relu((A X) W' + b'); padded lanes stay exactly zero.
    g = 0
    hcat = jnp.maximum(layer(mm(a, x_pad), g), 0.0).astype(bf16)     # (N,128)
    g += 1

    # ---- inception blocks: hcat is the lane-dense running concat.
    f_in = hidden
    width = nb * hidden                    # new columns appended per block
    for _ in range(nl):
        ah = mm(a, hcat)                   # A @ concat, hoisted, shared by all branches
        # depth 0: first layer of every branch, column-fused into one matmul.
        y = jnp.maximum(layer(ah, g), 0.0).astype(bf16)              # (N,128)
        g += 1
        # depth d >= 1: branches i >= d apply their next layer in place; the
        # packed block-diagonal weight keeps finished branches' lanes at zero
        # and a single lane select merges the update.
        for d in range(1, nb):
            z = jnp.maximum(layer(mm(a, y), g), 0.0).astype(bf16)
            g += 1
            upd = (lane >= d * hidden) & (lane < width)
            y = jnp.where(upd, z, y)
        # torch.cat((concat, branch outputs), dim=1), kept lane-dense.
        tail = LANE - f_in - width
        pieces = [hcat[:, :f_in], y[:, :width]]
        if tail > 0:
            pieces.append(jnp.zeros((n, tail), bf16))
        hcat = jnp.concatenate(pieces, axis=1)
        f_in += width

    # ---- out_layer (conv + BN, no ReLU) + log_softmax over the real classes.
    logits = layer(mm(a, hcat), g)
    logits = jnp.where(lane < out_dim, logits, NEG_BIG)
    m = jnp.max(logits, axis=-1, keepdims=True)
    s = logits - m
    return s - jnp.log(jnp.sum(jnp.exp(s), axis=-1, keepdims=True))


# ------------------------------ Pallas wrapper --------------------------------
def incepgcn_pallas(a_bf16, x_pad, w_slab, b_slab, cfg):
    n = x_pad.shape[0]

    def kernel(a_ref, x_ref, w_ref, b_ref, o_ref):
        o_ref[...] = incep_math(a_ref[...], x_ref[...], w_ref, b_ref[...], cfg)

    n_groups = int(w_slab.shape[0])
    flops = n_groups * (2 * n * n * LANE + 2 * n * LANE * LANE)
    bytes_accessed = (a_bf16.size * 2 + x_pad.size * 2 + w_slab.size * 2
                      + b_slab.size * 4 + n * LANE * 4)

    # No grid: the whole graph is one VMEM-resident tile (N=32); full-array
    # memory_space specs skip pipeline/index-map codegen entirely.  For large N
    # add a leading "parallel" node-row grid axis and K-tile A_hat instead.
    return pl.pallas_call(
        kernel,
        out_shape=jax.ShapeDtypeStruct((n, LANE), jnp.float32),
        in_specs=[pl.BlockSpec(memory_space=pltpu.MemorySpace.VMEM) for _ in range(4)],
        out_specs=pl.BlockSpec(memory_space=pltpu.MemorySpace.VMEM),
        cost_estimate=pl.CostEstimate(flops=flops,
                                      transcendentals=n * (LANE + 1),
                                      bytes_accessed=bytes_accessed),
    )(a_bf16, x_pad, w_slab, b_slab)


# ------------------------- parameter folding / packing ------------------------
def fold_bn(p):
    """Fold eval-mode BatchNorm into the conv: W' = W*scale, b' = (b-mean)*scale+beta."""
    scale = p["gamma"] * jax.lax.rsqrt(p["var"] + BN_EPS)
    return p["W"] * scale[None, :], (p["b"] - p["mean"]) * scale + p["beta"]


def fold_and_pack(params, cfg):
    """Fold BN into every conv, fuse per-block branch layers of equal depth along
    output columns, and pack everything into one bf16 (G,128,128) weight slab
    plus one f32 (G_pad,128) bias slab."""
    hidden, nl, nb = cfg["hidden"], cfg["num_layers"], cfg["num_branches"]

    def padded(entries):
        w = jnp.zeros((LANE, LANE), jnp.float32)
        b = jnp.zeros((LANE,), jnp.float32)
        for wt, bi, row_off, col_off in entries:
            r, c = wt.shape
            w = w.at[row_off:row_off + r, col_off:col_off + c].set(wt)
            b = b.at[col_off:col_off + c].set(bi)
        return w, b

    groups = [padded([fold_bn(params["in_layer"]) + (0, 0)])]
    for blk in params["blocks"]:
        # depth 0: every branch's first layer reads the full concat (rows 0..f_in)
        groups.append(padded([fold_bn(br[0]) + (0, i * hidden)
                              for i, br in enumerate(blk)]))
        # depth d >= 1: branch i (i >= d) maps its own columns back onto its own columns
        for d in range(1, nb):
            groups.append(padded([fold_bn(blk[i][d]) + (i * hidden, i * hidden)
                                  for i in range(d, nb)]))
    groups.append(padded([fold_bn(params["out_layer"]) + (0, 0)]))

    assert len(groups) == 2 + nl * nb
    w_slab = jnp.stack([w for w, _ in groups]).astype(jnp.bfloat16)     # (G,128,128)
    b_rows = [b for _, b in groups]
    pad_rows = 8 * pl.cdiv(len(b_rows), 8) - len(b_rows)
    b_rows += [jnp.zeros((LANE,), jnp.float32)] * pad_rows
    b_slab = jnp.stack(b_rows)                                          # (G_pad,128)
    return w_slab, b_slab


def incepgcn_forward(params, x, a_hat, cfg):
    """Eval-mode forward."""
    # TODO(synk): Dropedge / F.dropout are training-only stochastic ops; identity here.
    n, in_dim = x.shape
    final_width = cfg["hidden"] * (1 + cfg["num_layers"] * cfg["num_branches"])
    assert in_dim <= LANE and cfg["out_dim"] <= LANE and final_width <= LANE
    w_slab, b_slab = fold_and_pack(params, cfg)
    x_pad = jnp.zeros((n, LANE), jnp.float32).at[:, :in_dim].set(x).astype(jnp.bfloat16)
    out = incepgcn_pallas(a_hat.astype(jnp.bfloat16), x_pad, w_slab, b_slab, cfg)
    return out[:, :cfg["out_dim"]]


# --------------------------- parameter construction ---------------------------
def make_gcn_params(key, f_in, f_out):
    # Glorot-uniform weights (as in PyG GCNConv), zero bias,
    # BatchNorm1d defaults: gamma=1, beta=0, running_mean=0, running_var=1.
    limit = (6.0 / (f_in + f_out)) ** 0.5
    w = jax.random.uniform(key, (f_in, f_out), jnp.float32, -limit, limit)
    return dict(
        W=w,
        b=jnp.zeros((f_out,), jnp.float32),
        gamma=jnp.ones((f_out,), jnp.float32),
        beta=jnp.zeros((f_out,), jnp.float32),
        mean=jnp.zeros((f_out,), jnp.float32),
        var=jnp.ones((f_out,), jnp.float32),
    )


def init_incepgcn(key, in_dim, out_dim, args):
    keys = iter(jax.random.split(key, 256))
    params = {"in_layer": make_gcn_params(next(keys), in_dim, args["hidden_dim"])}
    cur = args["hidden_dim"]
    blocks = []
    for _ in range(args["num_layers"]):
        branches = []
        for i in range(args["num_branches"]):
            branch = []
            for j in range(i + 1):
                fi = cur if j == 0 else args["hidden_dim"]
                branch.append(make_gcn_params(next(keys), fi, args["hidden_dim"]))
            branches.append(branch)
        blocks.append(branches)
        cur = cur + args["num_branches"] * args["hidden_dim"]
    params["blocks"] = blocks
    params["out_layer"] = make_gcn_params(next(keys), cur, out_dim)
    return params


# ------------------------------ pure-JAX reference ----------------------------
def _gcn_block_ref(a_hat, x, p, use_relu, use_logsoftmax=False):
    hp = jax.lax.Precision.HIGHEST
    h = jnp.dot(jnp.dot(a_hat, x, precision=hp), p["W"], precision=hp) + p["b"]
    h = (h - p["mean"]) / jnp.sqrt(p["var"] + BN_EPS) * p["gamma"] + p["beta"]
    if use_relu:
        h = jnp.maximum(h, 0.0)
    if use_logsoftmax:
        h = jax.nn.log_softmax(h, axis=-1)
    return h


def incepgcn_ref(params, x, a_hat):
    out = _gcn_block_ref(a_hat, x, params["in_layer"], True)
    for branches in params["blocks"]:
        pieces = [out]
        for branch in branches:
            branch_out = out
            for p in branch:
                branch_out = _gcn_block_ref(a_hat, branch_out, p, True)
            pieces.append(branch_out)
        out = jnp.concatenate(pieces, axis=1)
    return _gcn_block_ref(a_hat, out, params["out_layer"], False, True)


# ----------------------------------- main --------------------------------------
if __name__ == "__main__":
    key = jax.random.PRNGKey(0)
    k_feat, k_adj, k_params = jax.random.split(key, 3)

    N, in_dim, out_dim = 32, 8, 4
    args = dict(hidden_dim=16, num_layers=2, num_branches=2,
                self_loops=True, dropout=0.5, dropedge=0.0)
    cfg = dict(hidden=args["hidden_dim"], num_layers=args["num_layers"],
               num_branches=args["num_branches"], out_dim=out_dim)

    x = jax.random.normal(k_feat, (N, in_dim), jnp.float32)

    # Random symmetric adjacency, add self loops, symmetric GCN normalization.
    logits = jax.random.uniform(k_adj, (N, N))
    adj = ((logits + logits.T) > 1.0).astype(jnp.float32)
    adj = adj * (1.0 - jnp.eye(N, dtype=jnp.float32))
    a = adj + (jnp.eye(N, dtype=jnp.float32) if args["self_loops"] else 0.0)
    deg = jnp.sum(a, axis=1)
    d_inv_sqrt = jnp.where(deg > 0, 1.0 / jnp.sqrt(deg), 0.0)
    a_hat = a * d_inv_sqrt[:, None] * d_inv_sqrt[None, :]

    params = init_incepgcn(k_params, in_dim, out_dim, args)

    out = incepgcn_forward(params, x, a_hat, cfg)
    out = jax.block_until_ready(out)
    assert out.shape == (N, out_dim), out.shape

    # 1) Precision-matched check: the identical packed bf16-input / f32-accum math
    #    run as plain JAX ops (validates the kernel lowering + slab packing tightly).
    w_slab, b_slab = fold_and_pack(params, cfg)
    x_pad = jnp.zeros((N, LANE), jnp.float32).at[:, :in_dim].set(x).astype(jnp.bfloat16)
    ref_bf16 = incep_math(a_hat.astype(jnp.bfloat16), x_pad, w_slab, b_slab, cfg)[:, :out_dim]
    assert bool(jnp.max(jnp.abs(out - ref_bf16)) < 2e-3), "mismatch vs bf16-matched reference"

    # 2) Ground-truth check vs the unfused, f32 HIGHEST-precision, BN-unfolded
    #    reference; tolerance budgets bf16 rounding through 8 stacked GCN layers.
    ref_f32 = incepgcn_ref(params, x, a_hat)
    assert bool(jnp.max(jnp.abs(out - ref_f32)) < 1e-1), "mismatch vs f32 reference"

    print("KERNEL_OK")
</pallas_src>

<mosaic_0001>
module attributes {stable_mosaic.version = 11 : i64} {
  func.func @kernel(%arg0: memref<32x32xbf16, #tpu.memory_space<vmem>>, %arg1: memref<32x128xbf16, #tpu.memory_space<vmem>>, %arg2: memref<6x128x128xbf16, #tpu.memory_space<vmem>>, %arg3: memref<8x128xf32, #tpu.memory_space<vmem>>, %arg4: memref<32x128xf32, #tpu.memory_space<vmem>>) attributes {dimension_semantics = [], scalar_prefetch = 0 : i64, scratch_operands = 0 : i64, tpu.core_type = #tpu.core_type<tc>} {
    %c0 = arith.constant 0 : index
    %c0_0 = arith.constant 0 : index
    %0 = vector.load %arg0[%c0, %c0_0] : memref<32x32xbf16, #tpu.memory_space<vmem>>, vector<32x32xbf16>
    %c0_1 = arith.constant 0 : index
    %c0_2 = arith.constant 0 : index
    %1 = vector.load %arg1[%c0_1, %c0_2] : memref<32x128xbf16, #tpu.memory_space<vmem>>, vector<32x128xbf16>
    %c0_3 = arith.constant 0 : index
    %c0_4 = arith.constant 0 : index
    %2 = vector.load %arg3[%c0_3, %c0_4] : memref<8x128xf32, #tpu.memory_space<vmem>>, vector<8x128xf32>
    %3 = tpu.iota {dimensions = array<i32: 1>} : vector<32x128xi32>
    %cst = arith.constant dense<0.000000e+00> : vector<32x128xf32>
    %4 = tpu.matmul %0, %1, %cst {dimension_numbers = #tpu.dot_dimension_numbers<[1], [0], [0], [1], [0, 0, 1, 1], [], []>} : vector<32x32xbf16>, vector<32x128xbf16>, vector<32x128xf32> -> vector<32x128xf32>
    %5 = arith.truncf %4 : vector<32x128xf32> to vector<32x128xbf16>
    %c0_5 = arith.constant 0 : index
    %c0_6 = arith.constant 0 : index
    %c0_7 = arith.constant 0 : index
    %6 = vector.load %arg2[%c0_5, %c0_6, %c0_7] : memref<6x128x128xbf16, #tpu.memory_space<vmem>>, vector<1x128x128xbf16>
    %7 = vector.shape_cast %6 : vector<1x128x128xbf16> to vector<128x128xbf16>
    %cst_8 = arith.constant dense<0.000000e+00> : vector<32x128xf32>
    %8 = tpu.matmul %5, %7, %cst_8 {dimension_numbers = #tpu.dot_dimension_numbers<[1], [0], [0], [1], [0, 0, 1, 1], [], []>} : vector<32x128xbf16>, vector<128x128xbf16>, vector<32x128xf32> -> vector<32x128xf32>
    %9 = vector.extract_strided_slice %2 {offsets = [0, 0], sizes = [1, 128], strides = [1, 1]} : vector<8x128xf32> to vector<1x128xf32>
    %10 = vector.broadcast %9 : vector<1x128xf32> to vector<32x128xf32>
    %11 = arith.addf %8, %10 : vector<32x128xf32>
    %cst_9 = arith.constant 0.000000e+00 : f32
    %12 = vector.broadcast %cst_9 : f32 to vector<32x128xf32>
    %13 = arith.maximumf %11, %12 : vector<32x128xf32>
    %14 = arith.truncf %13 : vector<32x128xf32> to vector<32x128xbf16>
    %cst_10 = arith.constant dense<0.000000e+00> : vector<32x128xf32>
    %15 = tpu.matmul %0, %14, %cst_10 {dimension_numbers = #tpu.dot_dimension_numbers<[1], [0], [0], [1], [0, 0, 1, 1], [], []>} : vector<32x32xbf16>, vector<32x128xbf16>, vector<32x128xf32> -> vector<32x128xf32>
    %16 = arith.truncf %15 : vector<32x128xf32> to vector<32x128xbf16>
    %c1 = arith.constant 1 : index
    %c0_11 = arith.constant 0 : index
    %c0_12 = arith.constant 0 : index
    %17 = vector.load %arg2[%c1, %c0_11, %c0_12] : memref<6x128x128xbf16, #tpu.memory_space<vmem>>, vector<1x128x128xbf16>
    %18 = vector.shape_cast %17 : vector<1x128x128xbf16> to vector<128x128xbf16>
    %cst_13 = arith.constant dense<0.000000e+00> : vector<32x128xf32>
    %19 = tpu.matmul %16, %18, %cst_13 {dimension_numbers = #tpu.dot_dimension_numbers<[1], [0], [0], [1], [0, 0, 1, 1], [], []>} : vector<32x128xbf16>, vector<128x128xbf16>, vector<32x128xf32> -> vector<32x128xf32>
    %20 = vector.extract_strided_slice %2 {offsets = [1, 0], sizes = [1, 128], strides = [1, 1]} : vector<8x128xf32> to vector<1x128xf32>
    %21 = vector.broadcast %20 : vector<1x128xf32> to vector<32x128xf32>
    %22 = arith.addf %19, %21 : vector<32x128xf32>
    %cst_14 = arith.constant 0.000000e+00 : f32
    %23 = vector.broadcast %cst_14 : f32 to vector<32x128xf32>
    %24 = arith.maximumf %22, %23 : vector<32x128xf32>
    %25 = arith.truncf %24 : vector<32x128xf32> to vector<32x128xbf16>
    %cst_15 = arith.constant dense<0.000000e+00> : vector<32x128xf32>
    %26 = tpu.matmul %0, %25, %cst_15 {dimension_numbers = #tpu.dot_dimension_numbers<[1], [0], [0], [1], [0, 0, 1, 1], [], []>} : vector<32x32xbf16>, vector<32x128xbf16>, vector<32x128xf32> -> vector<32x128xf32>
    %27 = arith.truncf %26 : vector<32x128xf32> to vector<32x128xbf16>
    %c2 = arith.constant 2 : index
    %c0_16 = arith.constant 0 : index
    %c0_17 = arith.constant 0 : index
    %28 = vector.load %arg2[%c2, %c0_16, %c0_17] : memref<6x128x128xbf16, #tpu.memory_space<vmem>>, vector<1x128x128xbf16>
    %29 = vector.shape_cast %28 : vector<1x128x128xbf16> to vector<128x128xbf16>
    %cst_18 = arith.constant dense<0.000000e+00> : vector<32x128xf32>
    %30 = tpu.matmul %27, %29, %cst_18 {dimension_numbers = #tpu.dot_dimension_numbers<[1], [0], [0], [1], [0, 0, 1, 1], [], []>} : vector<32x128xbf16>, vector<128x128xbf16>, vector<32x128xf32> -> vector<32x128xf32>
    %31 = vector.extract_strided_slice %2 {offsets = [2, 0], sizes = [1, 128], strides = [1, 1]} : vector<8x128xf32> to vector<1x128xf32>
    %32 = vector.broadcast %31 : vector<1x128xf32> to vector<32x128xf32>
    %33 = arith.addf %30, %32 : vector<32x128xf32>
    %cst_19 = arith.constant 0.000000e+00 : f32
    %34 = vector.broadcast %cst_19 : f32 to vector<32x128xf32>
    %35 = arith.maximumf %33, %34 : vector<32x128xf32>
    %36 = arith.truncf %35 : vector<32x128xf32> to vector<32x128xbf16>
    %c16_i32 = arith.constant 16 : i32
    %37 = vector.broadcast %c16_i32 : i32 to vector<32x128xi32>
    %38 = arith.cmpi sge, %3, %37 : vector<32x128xi32>
    %c32_i32 = arith.constant 32 : i32
    %39 = vector.broadcast %c32_i32 : i32 to vector<32x128xi32>
    %40 = arith.cmpi slt, %3, %39 : vector<32x128xi32>
    %41 = arith.andi %38, %40 : vector<32x128xi1>
    %42 = arith.select %41, %36, %25 : vector<32x128xi1>, vector<32x128xbf16>
    %43 = vector.extract_strided_slice %14 {offsets = [0, 0], sizes = [32, 16], strides = [1, 1]} : vector<32x128xbf16> to vector<32x16xbf16>
    %44 = vector.extract_strided_slice %42 {offsets = [0, 0], sizes = [32, 32], strides = [1, 1]} : vector<32x128xbf16> to vector<32x32xbf16>
    %cst_20 = arith.constant 0.000000e+00 : bf16
    %45 = vector.broadcast %cst_20 : bf16 to vector<32x80xbf16>
    %46 = tpu.concatenate %43, %44, %45 in 1 : vector<32x16xbf16>, vector<32x32xbf16>, vector<32x80xbf16> -> vector<32x128xbf16>
    %cst_21 = arith.constant dense<0.000000e+00> : vector<32x128xf32>
    %47 = tpu.matmul %0, %46, %cst_21 {dimension_numbers = #tpu.dot_dimension_numbers<[1], [0], [0], [1], [0, 0, 1, 1], [], []>} : vector<32x32xbf16>, vector<32x128xbf16>, vector<32x128xf32> -> vector<32x128xf32>
    %48 = arith.truncf %47 : vector<32x128xf32> to vector<32x128xbf16>
    %c3 = arith.constant 3 : index
    %c0_22 = arith.constant 0 : index
    %c0_23 = arith.constant 0 : index
    %49 = vector.load %arg2[%c3, %c0_22, %c0_23] : memref<6x128x128xbf16, #tpu.memory_space<vmem>>, vector<1x128x128xbf16>
    %50 = vector.shape_cast %49 : vector<1x128x128xbf16> to vector<128x128xbf16>
    %cst_24 = arith.constant dense<0.000000e+00> : vector<32x128xf32>
    %51 = tpu.matmul %48, %50, %cst_24 {dimension_numbers = #tpu.dot_dimension_numbers<[1], [0], [0], [1], [0, 0, 1, 1], [], []>} : vector<32x128xbf16>, vector<128x128xbf16>, vector<32x128xf32> -> vector<32x128xf32>
    %52 = vector.extract_strided_slice %2 {offsets = [3, 0], sizes = [1, 128], strides = [1, 1]} : vector<8x128xf32> to vector<1x128xf32>
    %53 = vector.broadcast %52 : vector<1x128xf32> to vector<32x128xf32>
    %54 = arith.addf %51, %53 : vector<32x128xf32>
    %cst_25 = arith.constant 0.000000e+00 : f32
    %55 = vector.broadcast %cst_25 : f32 to vector<32x128xf32>
    %56 = arith.maximumf %54, %55 : vector<32x128xf32>
    %57 = arith.truncf %56 : vector<32x128xf32> to vector<32x128xbf16>
    %cst_26 = arith.constant dense<0.000000e+00> : vector<32x128xf32>
    %58 = tpu.matmul %0, %57, %cst_26 {dimension_numbers = #tpu.dot_dimension_numbers<[1], [0], [0], [1], [0, 0, 1, 1], [], []>} : vector<32x32xbf16>, vector<32x128xbf16>, vector<32x128xf32> -> vector<32x128xf32>
    %59 = arith.truncf %58 : vector<32x128xf32> to vector<32x128xbf16>
    %c4 = arith.constant 4 : index
    %c0_27 = arith.constant 0 : index
    %c0_28 = arith.constant 0 : index
    %60 = vector.load %arg2[%c4, %c0_27, %c0_28] : memref<6x128x128xbf16, #tpu.memory_space<vmem>>, vector<1x128x128xbf16>
    %61 = vector.shape_cast %60 : vector<1x128x128xbf16> to vector<128x128xbf16>
    %cst_29 = arith.constant dense<0.000000e+00> : vector<32x128xf32>
    %62 = tpu.matmul %59, %61, %cst_29 {dimension_numbers = #tpu.dot_dimension_numbers<[1], [0], [0], [1], [0, 0, 1, 1], [], []>} : vector<32x128xbf16>, vector<128x128xbf16>, vector<32x128xf32> -> vector<32x128xf32>
    %63 = vector.extract_strided_slice %2 {offsets = [4, 0], sizes = [1, 128], strides = [1, 1]} : vector<8x128xf32> to vector<1x128xf32>
    %64 = vector.broadcast %63 : vector<1x128xf32> to vector<32x128xf32>
    %65 = arith.addf %62, %64 : vector<32x128xf32>
    %cst_30 = arith.constant 0.000000e+00 : f32
    %66 = vector.broadcast %cst_30 : f32 to vector<32x128xf32>
    %67 = arith.maximumf %65, %66 : vector<32x128xf32>
    %68 = arith.truncf %67 : vector<32x128xf32> to vector<32x128xbf16>
    %c16_i32_31 = arith.constant 16 : i32
    %69 = vector.broadcast %c16_i32_31 : i32 to vector<32x128xi32>
    %70 = arith.cmpi sge, %3, %69 : vector<32x128xi32>
    %c32_i32_32 = arith.constant 32 : i32
    %71 = vector.broadcast %c32_i32_32 : i32 to vector<32x128xi32>
    %72 = arith.cmpi slt, %3, %71 : vector<32x128xi32>
    %73 = arith.andi %70, %72 : vector<32x128xi1>
    %74 = arith.select %73, %68, %57 : vector<32x128xi1>, vector<32x128xbf16>
    %75 = vector.extract_strided_slice %46 {offsets = [0, 0], sizes = [32, 48], strides = [1, 1]} : vector<32x128xbf16> to vector<32x48xbf16>
    %76 = vector.extract_strided_slice %74 {offsets = [0, 0], sizes = [32, 32], strides = [1, 1]} : vector<32x128xbf16> to vector<32x32xbf16>
    %cst_33 = arith.constant 0.000000e+00 : bf16
    %77 = vector.broadcast %cst_33 : bf16 to vector<32x48xbf16>
    %78 = tpu.concatenate %75, %76, %77 in 1 : vector<32x48xbf16>, vector<32x32xbf16>, vector<32x48xbf16> -> vector<32x128xbf16>
    %cst_34 = arith.constant dense<0.000000e+00> : vector<32x128xf32>
    %79 = tpu.matmul %0, %78, %cst_34 {dimension_numbers = #tpu.dot_dimension_numbers<[1], [0], [0], [1], [0, 0, 1, 1], [], []>} : vector<32x32xbf16>, vector<32x128xbf16>, vector<32x128xf32> -> vector<32x128xf32>
    %80 = arith.truncf %79 : vector<32x128xf32> to vector<32x128xbf16>
    %c5 = arith.constant 5 : index
    %c0_35 = arith.constant 0 : index
    %c0_36 = arith.constant 0 : index
    %81 = vector.load %arg2[%c5, %c0_35, %c0_36] : memref<6x128x128xbf16, #tpu.memory_space<vmem>>, vector<1x128x128xbf16>
    %82 = vector.shape_cast %81 : vector<1x128x128xbf16> to vector<128x128xbf16>
    %cst_37 = arith.constant dense<0.000000e+00> : vector<32x128xf32>
    %83 = tpu.matmul %80, %82, %cst_37 {dimension_numbers = #tpu.dot_dimension_numbers<[1], [0], [0], [1], [0, 0, 1, 1], [], []>} : vector<32x128xbf16>, vector<128x128xbf16>, vector<32x128xf32> -> vector<32x128xf32>
    %84 = vector.extract_strided_slice %2 {offsets = [5, 0], sizes = [1, 128], strides = [1, 1]} : vector<8x128xf32> to vector<1x128xf32>
    %85 = vector.broadcast %84 : vector<1x128xf32> to vector<32x128xf32>
    %86 = arith.addf %83, %85 : vector<32x128xf32>
    %c4_i32 = arith.constant 4 : i32
    %87 = vector.broadcast %c4_i32 : i32 to vector<32x128xi32>
    %88 = arith.cmpi slt, %3, %87 : vector<32x128xi32>
    %cst_38 = arith.constant -1.000000e+30 : f32
    %89 = vector.broadcast %cst_38 : f32 to vector<32x128xf32>
    %90 = arith.select %88, %86, %89 : vector<32x128xi1>, vector<32x128xf32>
    %cst_39 = arith.constant dense<0xFF800000> : vector<32xf32>
    %91 = vector.multi_reduction <maximumf>, %90, %cst_39 [1] : vector<32x128xf32> to vector<32xf32>
    %92 = vector.shape_cast %91 : vector<32xf32> to vector<32x1xf32>
    %93 = vector.broadcast %92 : vector<32x1xf32> to vector<32x128xf32>
    %94 = arith.subf %90, %93 : vector<32x128xf32>
    %95 = math.exp %94 : vector<32x128xf32>
    %cst_40 = arith.constant dense<0.000000e+00> : vector<32xf32>
    %96 = vector.multi_reduction <add>, %95, %cst_40 [1] : vector<32x128xf32> to vector<32xf32>
    %97 = vector.shape_cast %96 : vector<32xf32> to vector<32x1xf32>
    %98 = math.log %97 : vector<32x1xf32>
    %99 = vector.broadcast %98 : vector<32x1xf32> to vector<32x128xf32>
    %100 = arith.subf %94, %99 : vector<32x128xf32>
    %c0_41 = arith.constant 0 : index
    %c0_42 = arith.constant 0 : index
    %101 = vector.load %arg4[%c0_41, %c0_42] : memref<32x128xf32, #tpu.memory_space<vmem>>, vector<32x128xf32>
    tpu.vector_store %arg4[%c0_41, %c0_42], %100 {strides = array<i32>} : memref<32x128xf32, #tpu.memory_space<vmem>>, vector<32x128xf32>,
    return
  }
}

</mosaic_0001>

<llo_original>
// kernel: tpu_custom_call.1
$region0: #{tpu_custom_call.1}
  #allocation0 [shape = 'u32[]', space=smem, size = 0x4, offset = 0x4, fixed_abs, tag = 'smem constant byte address 0x4 - core index']
  #allocation1 [shape = 'u32[144,128]{1,0:T(1,128)}', space=vmem, size = 0x12000, scoped, tag = 'internal scratch']
  %s0 = inlined_call_operand.hbm [shape: bf16[32,32], index: 0, kind: input, shape index: {}]
  %s1 = inlined_call_operand.hbm [shape: bf16[32,128], index: 1, kind: input, shape index: {}]
  %s2 = inlined_call_operand.hbm [shape: bf16[6,128,128], index: 2, kind: input, shape index: {}]
  %s3 = inlined_call_operand.vmem [shape: f32[8,128], index: 3, kind: input, shape index: {}]
  %s4 = inlined_call_operand.hbm [shape: f32[32,128], index: 4, kind: output, shape index: {}]
  %s5 = sld [smem:[#allocation0]]
  $region38: #{tpu_custom_call.1} parent=0
    _
  %s7 = ssub.s32 1, %s5
  %s8 = scalar_select 0, %s7, %s5
  $region1: #{tpu_custom_call.1} parent=0
    #allocation2 [shape = 'u8[8192]{0}', space=vmem, size = 0x2000, scoped, tag = 'input window, operand 0, single buffered']
    #allocation3 [shape = 's32[1]{0}', space=sflag, size = 0x4, scoped, tag = 'scoped memory for tpu_custom_call.1']
    #allocation4 [shape = 's32[1]{0}', space=sflag, size = 0x4, scoped, tag = 'scoped memory for tpu_custom_call.1']
    #allocation5 [shape = 'u8[8192]{0}', space=vmem, size = 0x2000, scoped, tag = 'input window, operand 1, single buffered']
    #allocation6 [shape = 's32[1]{0}', space=sflag, size = 0x4, scoped, tag = 'scoped memory for tpu_custom_call.1']
    #allocation7 [shape = 'u8[196608]{0}', space=vmem, size = 0x30000, scoped, tag = 'input window, operand 2, single buffered']
    #allocation8 [shape = 'u8[16384]{0}', space=vmem, size = 0x4000, scoped, tag = 'output window, operand 0, single buffered']
    %9 = vsyncpa [#allocation3], 0
    %10 = vsyncpa [#allocation6], 0
    %11 = vsyncpa [#allocation4], 0
    // Predicated region
    $region2: #{tpu_custom_call.1} parent=1 // pred_check
      _
    $region3: #{tpu_custom_call.1} parent=1 // pred_check_branch
      %13 = sbr.rel (0) target = $region5
    $region4: #{tpu_custom_call.1} parent=1 // pred_region
      %s15 = ssub.s32 256, 256
      %16 = vsyncadd [#allocation3], %s15
      %s17 = sshll.u32 [#allocation2], 4
      %s18 = int_to_ptr.vmem [resolvable:$true] %s17
      %23 = dma.hbm_to_vmem [thread:$0]  %s0, 256, %s18, [#allocation3], 64, 64, 4
    $region5: #{tpu_custom_call.1} parent=1 // pred_fallthru
      _
    // Predicated region
    $region6: #{tpu_custom_call.1} parent=1 // pred_check
      _
    $region7: #{tpu_custom_call.1} parent=1 // pred_check_branch
      %25 = sbr.rel (0) target = $region9
    $region8: #{tpu_custom_call.1} parent=1 // pred_region
      %s27 = ssub.s32 256, 256
      %28 = vsyncadd [#allocation6], %s27
      %s29 = sshll.u32 [#allocation5], 4
      %s30 = int_to_ptr.vmem [resolvable:$true] %s29
      %35 = dma.hbm_to_vmem [thread:$0]  %s1, 256, %s30, [#allocation6], 64, 64, 4
    $region9: #{tpu_custom_call.1} parent=1 // pred_fallthru
      _
    // Predicated region
    $region10: #{tpu_custom_call.1} parent=1 // pred_check
      _
    $region11: #{tpu_custom_call.1} parent=1 // pred_check_branch
      %37 = sbr.rel (0) target = $region13
    $region12: #{tpu_custom_call.1} parent=1 // pred_region
      %s39 = ssub.s32 6144, 6144
      %40 = vsyncadd [#allocation6], %s39
      %s41 = sshll.u32 [#allocation7], 4
      %s42 = int_to_ptr.vmem [resolvable:$true] %s41
      %47 = dma.hbm_to_vmem [thread:$0]  %s2, 6144, %s42, [#allocation6], 64, 64, 4
    $region13: #{tpu_custom_call.1} parent=1 // pred_fallthru
      _
    // Predicated region
    $region14: #{tpu_custom_call.1} parent=1 // pred_check
      _
    $region15: #{tpu_custom_call.1} parent=1 // pred_check_branch
      %49 = sbr.rel (0) target = $region17
    $region16: #{tpu_custom_call.1} parent=1 // pred_region
      _
    $region17: #{tpu_custom_call.1} parent=1 // pred_fallthru
      _
    // Predicated region
    $region18: #{tpu_custom_call.1} parent=1 // pred_check
      _
    $region19: #{tpu_custom_call.1} parent=1 // pred_check_branch
      %51 = sbr.rel (0) target = $region21
    $region20: #{tpu_custom_call.1} parent=1 // pred_region
      %52 = dma.done [#allocation3], 256
    $region21: #{tpu_custom_call.1} parent=1 // pred_fallthru
      _
    // Predicated region
    $region22: #{tpu_custom_call.1} parent=1 // pred_check
      _
    $region23: #{tpu_custom_call.1} parent=1 // pred_check_branch
      %54 = sbr.rel (0) target = $region25
    $region24: #{tpu_custom_call.1} parent=1 // pred_region
      %55 = dma.done [#allocation6], 256
    $region25: #{tpu_custom_call.1} parent=1 // pred_fallthru
      _
    // Predicated region
    $region26: #{tpu_custom_call.1} parent=1 // pred_check
      _
    $region27: #{tpu_custom_call.1} parent=1 // pred_check_branch
      %57 = sbr.rel (0) target = $region29
    $region28: #{tpu_custom_call.1} parent=1 // pred_region
      %58 = dma.done [#allocation6], 6144
    $region29: #{tpu_custom_call.1} parent=1 // pred_fallthru
      _
    %v62 = vld [vmem:[#allocation2] sm:$0xf]
    %v63 = vld [vmem:[#allocation2 + $0x4] sm:$0xf]
    %v64 = vld [vmem:[#allocation2 + $0x8] sm:$0xf]
    %v65 = vld [vmem:[#allocation2 + $0xc] sm:$0xf]
    %v66 = vld [vmem:[#allocation5] sm:$0xf]
    %v67 = vld [vmem:[#allocation5 + $0x4] sm:$0xf]
    %v68 = vld [vmem:[#allocation5 + $0x8] sm:$0xf]
    %v69 = vld [vmem:[#allocation5 + $0xc] sm:$0xf]
    %v70 = vld [vmem:[%s3] sm:$0xff]
    %v71 = vlaneseq
    %v72 = vand.u32 %v71, 127
    %v77 = vunpack.c.l.b16 %v62
    %v78 = vunpack.c.l.b16 %v63
    %v79 = vunpack.c.l.b16 %v64
    %v80 = vunpack.c.l.b16 %v65
    %v81 = vpack.c.b16 %v78, %v77
    %v82 = vpack.c.b16 %v80, %v79
    %v87 = vunpack.c.l.b16 %v66
    %v88 = vunpack.c.l.b16 %v67
    %v89 = vunpack.c.l.b16 %v68
    %v90 = vunpack.c.l.b16 %v69
    %v91 = vpack.c.b16 %v88, %v87
    %v92 = vpack.c.b16 %v90, %v89
    %vm95 = vcmask 261120
    %v97 = vsel %vm95, %v81, 0
    %v100 = vsel %vm95, %v82, 0
    %102 = vmatprep.subr.bf16.mxu0 0
    %103 = vmatpush1.bf16.msra.mxu0 %v91
    %104 = vmatprep.subr.bf16.mxu0 0
    %105 = vmatpush1.bf16.msra.mxu0 %v92
    %106 = vmatprep.subr.bf16.mxu0 0
    %107 = vmatpush1.bf16.msra.mxu0 0
    %108 = vmatprep.subr.bf16.mxu0 0
    %109 = vmatpush1.bf16.msra.mxu0 0
    %110 = vmatprep.subr.bf16.mxu0 0
    %111 = vmatpush1.bf16.msra.mxu0 0
    %112 = vmatprep.subr.bf16.mxu0 0
    %113 = vmatpush1.bf16.msra.mxu0 0
    %114 = vmatprep.subr.bf16.mxu0 0
    %115 = vmatpush1.bf16.msra.mxu0 0
    %116 = vmatprep.subr.bf16.mxu0 0
    %117 = vmatpush1.bf16.msra.mxu0 0
    %118 = vmatprep.subr.bf16.mxu0 0
    %119 = vmatpush1.bf16.msra.mxu0 0
    %120 = vmatprep.subr.bf16.mxu0 0
    %121 = vmatpush1.bf16.msra.mxu0 0
    %122 = vmatprep.subr.bf16.mxu0 0
    %123 = vmatpush1.bf16.msra.mxu0 0
    %124 = vmatprep.subr.bf16.mxu0 0
    %125 = vmatpush1.bf16.msra.mxu0 0
    %126 = vmatprep.subr.bf16.mxu0 0
    %127 = vmatpush1.bf16.msra.mxu0 0
    %128 = vmatprep.subr.bf16.mxu0 0
    %129 = vmatpush1.bf16.msra.mxu0 0
    %130 = vmatprep.subr.bf16.mxu0 0
    %131 = vmatpush1.bf16.msra.mxu0 0
    %132 = vmatprep.subr.bf16.mxu0 0
    %133 = vmatpush1.bf16.msra.mxu0 0
    %134 = vmatprep.mubr.bf16.mxu0 0
    %135 = vmatmul.mubr.bf16.gmra.mrb[0].mxu0 %v97
    %v136 = vpop.f32.mrb[0].mxu0
    %v137 = vadd.f32 0.0, %v136
    %v138 = vpop.f32.mrb[0].mxu0
    %v139 = vpop.f32.mrb[0].mxu0
    %v140 = vadd.f32 0.0, %v139
    %v141 = vpop.f32.mrb[0].mxu0
    %142 = vmatprep.mubr.bf16.mxu0 0
    %143 = vmatmul.mubr.bf16.gmra.mrb[0].mxu0 %v100
    %v144 = vpop.f32.mrb[0].mxu0
    %v145 = vadd.f32 0.0, %v144
    %v146 = vpop.f32.mrb[0].mxu0
    %v147 = vpop.f32.mrb[0].mxu0
    %v148 = vadd.f32 0.0, %v147
    %v149 = vpop.f32.mrb[0].mxu0
    %150 = vdwg.mxu0
    %v151 = vpack.c.bf16 %v140, %v137
    %v152 = vpack.c.bf16 %v148, %v145
    %v153 = vld [vmem:[#allocation7] sm:$0xf]
    %v154 = vld [vmem:[#allocation7 + $0x4] sm:$0xf]
    %v155 = vld [vmem:[#allocation7 + $0x8] sm:$0xf]
    %v156 = vld [vmem:[#allocation7 + $0xc] sm:$0xf]
    %v157 = vld [vmem:[#allocation7 + $0x10] sm:$0xf]
    %v158 = vld [vmem:[#allocation7 + $0x14] sm:$0xf]
    %v159 = vld [vmem:[#allocation7 + $0x18] sm:$0xf]
    %v160 = vld [vmem:[#allocation7 + $0x1c] sm:$0xf]
    %v161 = vld [vmem:[#allocation7 + $0x20] sm:$0xf]
    %v162 = vld [vmem:[#allocation7 + $0x24] sm:$0xf]
    %v163 = vld [vmem:[#allocation7 + $0x28] sm:$0xf]
    %v164 = vld [vmem:[#allocation7 + $0x2c] sm:$0xf]
    %v165 = vld [vmem:[#allocation7 + $0x30] sm:$0xf]
    %v166 = vld [vmem:[#allocation7 + $0x34] sm:$0xf]
    %v167 = vld [vmem:[#allocation7 + $0x38] sm:$0xf]
    %v168 = vld [vmem:[#allocation7 + $0x3c] sm:$0xf]
    %v169 = vlaneseq
    %v170 = vshrl.u32 %v169, 7
    %v171 = vsub.s32 0, %v170
    %v172 = vrot.slane %v70, %v171
    %v189 = vunpack.c.l.b16 %v153
    %v190 = vunpack.c.l.b16 %v154
    %v191 = vunpack.c.l.b16 %v155
    %v192 = vunpack.c.l.b16 %v156
    %v193 = vunpack.c.l.b16 %v157
    %v194 = vunpack.c.l.b16 %v158
    %v195 = vunpack.c.l.b16 %v159
    %v196 = vunpack.c.l.b16 %v160
    %v197 = vunpack.c.l.b16 %v161
    %v198 = vunpack.c.l.b16 %v162
    %v199 = vunpack.c.l.b16 %v163
    %v200 = vunpack.c.l.b16 %v164
    %v201 = vunpack.c.l.b16 %v165
    %v202 = vunpack.c.l.b16 %v166
    %v203 = vunpack.c.l.b16 %v167
    %v204 = vunpack.c.l.b16 %v168
    %v205 = vpack.c.b16 %v190, %v189
    %v206 = vpack.c.b16 %v192, %v191
    %v207 = vpack.c.b16 %v194, %v193
    %v208 = vpack.c.b16 %v196, %v195
    %v209 = vpack.c.b16 %v198, %v197
    %v210 = vpack.c.b16 %v200, %v199
    %v211 = vpack.c.b16 %v202, %v201
    %v212 = vpack.c.b16 %v204, %v203
    %221 = vmatprep.subr.bf16.mxu0 0
    %222 = vmatpush1.bf16.msra.mxu0 %v205
    %223 = vmatprep.subr.bf16.mxu0 0
    %224 = vmatpush1.bf16.msra.mxu0 %v206
    %225 = vmatprep.subr.bf16.mxu0 0
    %226 = vmatpush1.bf16.msra.mxu0 %v207
    %227 = vmatprep.subr.bf16.mxu0 0
    %228 = vmatpush1.bf16.msra.mxu0 %v208
    %229 = vmatprep.subr.bf16.mxu0 0
    %230 = vmatpush1.bf16.msra.mxu0 %v209
    %231 = vmatprep.subr.bf16.mxu0 0
    %232 = vmatpush1.bf16.msra.mxu0 %v210
    %233 = vmatprep.subr.bf16.mxu0 0
    %234 = vmatpush1.bf16.msra.mxu0 %v211
    %235 = vmatprep.subr.bf16.mxu0 0
    %236 = vmatpush1.bf16.msra.mxu0 %v212
    %237 = vmatprep.subr.bf16.mxu0 0
    %238 = vmatpush1.bf16.msra.mxu0 0
    %239 = vmatprep.subr.bf16.mxu0 0
    %240 = vmatpush1.bf16.msra.mxu0 0
    %241 = vmatprep.subr.bf16.mxu0 0
    %242 = vmatpush1.bf16.msra.mxu0 0
    %243 = vmatprep.subr.bf16.mxu0 0
    %244 = vmatpush1.bf16.msra.mxu0 0
    %245 = vmatprep.subr.bf16.mxu0 0
    %246 = vmatpush1.bf16.msra.mxu0 0
    %247 = vmatprep.subr.bf16.mxu0 0
    %248 = vmatpush1.bf16.msra.mxu0 0
    %249 = vmatprep.subr.bf16.mxu0 0
    %250 = vmatpush1.bf16.msra.mxu0 0
    %251 = vmatprep.subr.bf16.mxu0 0
    %252 = vmatpush1.bf16.msra.mxu0 0
    %253 = vmatprep.mubr.bf16.mxu0 0
    %254 = vmatmul.mubr.bf16.gmra.mrb[0].mxu0 %v151
    %v255 = vpop.f32.mrb[0].mxu0
    %v256 = vadd.f32 %v172, %v255
    %v257 = vpop.f32.mrb[0].mxu0
    %v258 = vpop.f32.mrb[0].mxu0
    %v259 = vadd.f32 %v172, %v258
    %v260 = vpop.f32.mrb[0].mxu0
    %261 = vmatprep.mubr.bf16.mxu0 0
    %262 = vmatmul.mubr.bf16.gmra.mrb[0].mxu0 %v152
    %v263 = vpop.f32.mrb[0].mxu0
    %v264 = vadd.f32 %v172, %v263
    %v265 = vpop.f32.mrb[0].mxu0
    %v266 = vpop.f32.mrb[0].mxu0
    %v267 = vadd.f32 %v172, %v266
    %v268 = vpop.f32.mrb[0].mxu0
    %269 = vdwg.mxu0
    %v270 = vmax.f32 %v256, 0.0
    %v271 = vmax.f32 %v259, 0.0
    %v272 = vmax.f32 %v264, 0.0
    %v273 = vmax.f32 %v267, 0.0
    %v274 = vpack.c.bf16 %v271, %v270
    %v275 = vpack.c.bf16 %v273, %v272
    %276 = vmatprep.subr.bf16.mxu0 0
    %277 = vmatpush1.bf16.msra.mxu0 %v274
    %278 = vmatprep.subr.bf16.mxu0 0
    %279 = vmatpush1.bf16.msra.mxu0 %v275
    %280 = vmatprep.subr.bf16.mxu0 0
    %281 = vmatpush1.bf16.msra.mxu0 0
    %282 = vmatprep.subr.bf16.mxu0 0
    %283 = vmatpush1.bf16.msra.mxu0 0
    %284 = vmatprep.subr.bf16.mxu0 0
    %285 = vmatpush1.bf16.msra.mxu0 0
    %286 = vmatprep.subr.bf16.mxu0 0
    %287 = vmatpush1.bf16.msra.mxu0 0
    %288 = vmatprep.subr.bf16.mxu0 0
    %289 = vmatpush1.bf16.msra.mxu0 0
    %290 = vmatprep.subr.bf16.mxu0 0
    %291 = vmatpush1.bf16.msra.mxu0 0
    %292 = vmatprep.subr.bf16.mxu0 0
    %293 = vmatpush1.bf16.msra.mxu0 0
    %294 = vmatprep.subr.bf16.mxu0 0
    %295 = vmatpush1.bf16.msra.mxu0 0
    %296 = vmatprep.subr.bf16.mxu0 0
    %297 = vmatpush1.bf16.msra.mxu0 0
    %298 = vmatprep.subr.bf16.mxu0 0
    %299 = vmatpush1.bf16.msra.mxu0 0
    %300 = vmatprep.subr.bf16.mxu0 0
    %301 = vmatpush1.bf16.msra.mxu0 0
    %302 = vmatprep.subr.bf16.mxu0 0
    %303 = vmatpush1.bf16.msra.mxu0 0
    %304 = vmatprep.subr.bf16.mxu0 0
    %305 = vmatpush1.bf16.msra.mxu0 0
    %306 = vmatprep.subr.bf16.mxu0 0
    %307 = vmatpush1.bf16.msra.mxu0 0
    %308 = vmatprep.mubr.bf16.mxu0 0
    %309 = vmatmul.mubr.bf16.gmra.mrb[0].mxu0 %v97
    %v310 = vpop.f32.mrb[0].mxu0
    %v311 = vadd.f32 0.0, %v310
    %v312 = vpop.f32.mrb[0].mxu0
    %v313 = vpop.f32.mrb[0].mxu0
    %v314 = vadd.f32 0.0, %v313
    %v315 = vpop.f32.mrb[0].mxu0
    %316 = vmatprep.mubr.bf16.mxu0 0
    %317 = vmatmul.mubr.bf16.gmra.mrb[0].mxu0 %v100
    %v318 = vpop.f32.mrb[0].mxu0
    %v319 = vadd.f32 0.0, %v318
    %v320 = vpop.f32.mrb[0].mxu0
    %v321 = vpop.f32.mrb[0].mxu0
    %v322 = vadd.f32 0.0, %v321
    %v323 = vpop.f32.mrb[0].mxu0
    %324 = vdwg.mxu0
    %v325 = vpack.c.bf16 %v314, %v311
    %v326 = vpack.c.bf16 %v322, %v319
    %s327 = scalar_lea.vmem [#allocation7], 64
    %v328 = vld [vmem:[%s327] sm:$0xf]
    %v329 = vld [vmem:[%s327 + $0x4] sm:$0xf]
    %v330 = vld [vmem:[%s327 + $0x8] sm:$0xf]
    %v331 = vld [vmem:[%s327 + $0xc] sm:$0xf]
    %v332 = vld [vmem:[%s327 + $0x10] sm:$0xf]
    %v333 = vld [vmem:[%s327 + $0x14] sm:$0xf]
    %v334 = vld [vmem:[%s327 + $0x18] sm:$0xf]
    %v335 = vld [vmem:[%s327 + $0x1c] sm:$0xf]
    %v336 = vld [vmem:[%s327 + $0x20] sm:$0xf]
    %v337 = vld [vmem:[%s327 + $0x24] sm:$0xf]
    %v338 = vld [vmem:[%s327 + $0x28] sm:$0xf]
    %v339 = vld [vmem:[%s327 + $0x2c] sm:$0xf]
    %v340 = vld [vmem:[%s327 + $0x30] sm:$0xf]
    %v341 = vld [vmem:[%s327 + $0x34] sm:$0xf]
    %v342 = vld [vmem:[%s327 + $0x38] sm:$0xf]
    %v343 = vld [vmem:[%s327 + $0x3c] sm:$0xf]
    %v344 = vlaneseq
    %v345 = vshrl.u32 %v344, 7
    %v346 = vsub.s32 1, %v345
    %v347 = vrot.slane %v70, %v346
    %v364 = vunpack.c.l.b16 %v328
    %v365 = vunpack.c.l.b16 %v329
    %v366 = vunpack.c.l.b16 %v330
    %v367 = vunpack.c.l.b16 %v331
    %v368 = vunpack.c.l.b16 %v332
    %v369 = vunpack.c.l.b16 %v333
    %v370 = vunpack.c.l.b16 %v334
    %v371 = vunpack.c.l.b16 %v335
    %v372 = vunpack.c.l.b16 %v336
    %v373 = vunpack.c.l.b16 %v337
    %v374 = vunpack.c.l.b16 %v338
    %v375 = vunpack.c.l.b16 %v339
    %v376 = vunpack.c.l.b16 %v340
    %v377 = vunpack.c.l.b16 %v341
    %v378 = vunpack.c.l.b16 %v342
    %v379 = vunpack.c.l.b16 %v343
    %v380 = vpack.c.b16 %v365, %v364
    %v381 = vpack.c.b16 %v367, %v366
    %v382 = vpack.c.b16 %v369, %v368
    %v383 = vpack.c.b16 %v371, %v370
    %v384 = vpack.c.b16 %v373, %v372
    %v385 = vpack.c.b16 %v375, %v374
    %v386 = vpack.c.b16 %v377, %v376
    %v387 = vpack.c.b16 %v379, %v378
    %396 = vmatprep.subr.bf16.mxu0 0
    %397 = vmatpush1.bf16.msra.mxu0 %v380
    %398 = vmatprep.subr.bf16.mxu0 0
    %399 = vmatpush1.bf16.msra.mxu0 %v381
    %400 = vmatprep.subr.bf16.mxu0 0
    %401 = vmatpush1.bf16.msra.mxu0 %v382
    %402 = vmatprep.subr.bf16.mxu0 0
    %403 = vmatpush1.bf16.msra.mxu0 %v383
    %404 = vmatprep.subr.bf16.mxu0 0
    %405 = vmatpush1.bf16.msra.mxu0 %v384
    %406 = vmatprep.subr.bf16.mxu0 0
    %407 = vmatpush1.bf16.msra.mxu0 %v385
    %408 = vmatprep.subr.bf16.mxu0 0
    %409 = vmatpush1.bf16.msra.mxu0 %v386
    %410 = vmatprep.subr.bf16.mxu0 0
    %411 = vmatpush1.bf16.msra.mxu0 %v387
    %412 = vmatprep.subr.bf16.mxu0 0
    %413 = vmatpush1.bf16.msra.mxu0 0
    %414 = vmatprep.subr.bf16.mxu0 0
    %415 = vmatpush1.bf16.msra.mxu0 0
    %416 = vmatprep.subr.bf16.mxu0 0
    %417 = vmatpush1.bf16.msra.mxu0 0
    %418 = vmatprep.subr.bf16.mxu0 0
    %419 = vmatpush1.bf16.msra.mxu0 0
    %420 = vmatprep.subr.bf16.mxu0 0
    %421 = vmatpush1.bf16.msra.mxu0 0
    %422 = vmatprep.subr.bf16.mxu0 0
    %423 = vmatpush1.bf16.msra.mxu0 0
    %424 = vmatprep.subr.bf16.mxu0 0
    %425 = vmatpush1.bf16.msra.mxu0 0
    %426 = vmatprep.subr.bf16.mxu0 0
    %427 = vmatpush1.bf16.msra.mxu0 0
    %428 = vmatprep.mubr.bf16.mxu0 0
    %429 = vmatmul.mubr.bf16.gmra.mrb[0].mxu0 %v325
    %v430 = vpop.f32.mrb[0].mxu0
    %v431 = vadd.f32 %v347, %v430
    %v432 = vpop.f32.mrb[0].mxu0
    %v433 = vpop.f32.mrb[0].mxu0
    %v434 = vadd.f32 %v347, %v433
    %v435 = vpop.f32.mrb[0].mxu0
    %436 = vmatprep.mubr.bf16.mxu0 0
    %437 = vmatmul.mubr.bf16.gmra.mrb[0].mxu0 %v326
    %v438 = vpop.f32.mrb[0].mxu0
    %v439 = vadd.f32 %v347, %v438
    %v440 = vpop.f32.mrb[0].mxu0
    %v441 = vpop.f32.mrb[0].mxu0
    %v442 = vadd.f32 %v347, %v441
    %v443 = vpop.f32.mrb[0].mxu0
    %444 = vdwg.mxu0
    %v445 = vmax.f32 %v431, 0.0
    %v446 = vmax.f32 %v434, 0.0
    %v447 = vmax.f32 %v439, 0.0
    %v448 = vmax.f32 %v442, 0.0
    %v449 = vpack.c.bf16 %v446, %v445
    %v450 = vpack.c.bf16 %v448, %v447
    %451 = vmatprep.subr.bf16.mxu0 0
    %452 = vmatpush1.bf16.msra.mxu0 %v449
    %453 = vmatprep.subr.bf16.mxu0 0
    %454 = vmatpush1.bf16.msra.mxu0 %v450
    %455 = vmatprep.subr.bf16.mxu0 0
    %456 = vmatpush1.bf16.msra.mxu0 0
    %457 = vmatprep.subr.bf16.mxu0 0
    %458 = vmatpush1.bf16.msra.mxu0 0
    %459 = vmatprep.subr.bf16.mxu0 0
    %460 = vmatpush1.bf16.msra.mxu0 0
    %461 = vmatprep.subr.bf16.mxu0 0
    %462 = vmatpush1.bf16.msra.mxu0 0
    %463 = vmatprep.subr.bf16.mxu0 0
    %464 = vmatpush1.bf16.msra.mxu0 0
    %465 = vmatprep.subr.bf16.mxu0 0
    %466 = vmatpush1.bf16.msra.mxu0 0
    %467 = vmatprep.subr.bf16.mxu0 0
    %468 = vmatpush1.bf16.msra.mxu0 0
    %469 = vmatprep.subr.bf16.mxu0 0
    %470 = vmatpush1.bf16.msra.mxu0 0
    %471 = vmatprep.subr.bf16.mxu0 0
    %472 = vmatpush1.bf16.msra.mxu0 0
    %473 = vmatprep.subr.bf16.mxu0 0
    %474 = vmatpush1.bf16.msra.mxu0 0
    %475 = vmatprep.subr.bf16.mxu0 0
    %476 = vmatpush1.bf16.msra.mxu0 0
    %477 = vmatprep.subr.bf16.mxu0 0
    %478 = vmatpush1.bf16.msra.mxu0 0
    %479 = vmatprep.subr.bf16.mxu0 0
    %480 = vmatpush1.bf16.msra.mxu0 0
    %481 = vmatprep.subr.bf16.mxu0 0
    %482 = vmatpush1.bf16.msra.mxu0 0
    %483 = vmatprep.mubr.bf16.mxu0 0
    %484 = vmatmul.mubr.bf16.gmra.mrb[0].mxu0 %v97
    %v485 = vpop.f32.mrb[0].mxu0
    %v486 = vadd.f32 0.0, %v485
    %v487 = vpop.f32.mrb[0].mxu0
    %v488 = vpop.f32.mrb[0].mxu0
    %v489 = vadd.f32 0.0, %v488
    %v490 = vpop.f32.mrb[0].mxu0
    %491 = vmatprep.mubr.bf16.mxu0 0
    %492 = vmatmul.mubr.bf16.gmra.mrb[0].mxu0 %v100
    %v493 = vpop.f32.mrb[0].mxu0
    %v494 = vadd.f32 0.0, %v493
    %v495 = vpop.f32.mrb[0].mxu0
    %v496 = vpop.f32.mrb[0].mxu0
    %v497 = vadd.f32 0.0, %v496
    %v498 = vpop.f32.mrb[0].mxu0
    %499 = vdwg.mxu0
    %v500 = vpack.c.bf16 %v489, %v486
    %v501 = vpack.c.bf16 %v497, %v494
    %s502 = scalar_lea.vmem [#allocation7], 128
    %v503 = vld [vmem:[%s502] sm:$0xf]
    %v504 = vld [vmem:[%s502 + $0x4] sm:$0xf]
    %v505 = vld [vmem:[%s502 + $0x8] sm:$0xf]
    %v506 = vld [vmem:[%s502 + $0xc] sm:$0xf]
    %v507 = vld [vmem:[%s502 + $0x10] sm:$0xf]
    %v508 = vld [vmem:[%s502 + $0x14] sm:$0xf]
    %v509 = vld [vmem:[%s502 + $0x18] sm:$0xf]
    %v510 = vld [vmem:[%s502 + $0x1c] sm:$0xf]
    %v511 = vld [vmem:[%s502 + $0x20] sm:$0xf]
    %v512 = vld [vmem:[%s502 + $0x24] sm:$0xf]
    %v513 = vld [vmem:[%s502 + $0x28] sm:$0xf]
    %v514 = vld [vmem:[%s502 + $0x2c] sm:$0xf]
    %v515 = vld [vmem:[%s502 + $0x30] sm:$0xf]
    %v516 = vld [vmem:[%s502 + $0x34] sm:$0xf]
    %v517 = vld [vmem:[%s502 + $0x38] sm:$0xf]
    %v518 = vld [vmem:[%s502 + $0x3c] sm:$0xf]
    %v519 = vlaneseq
    %v520 = vshrl.u32 %v519, 7
    %v521 = vsub.s32 2, %v520
    %v522 = vrot.slane %v70, %v521
    %v539 = vunpack.c.l.b16 %v503
    %v540 = vunpack.c.l.b16 %v504
    %v541 = vunpack.c.l.b16 %v505
    %v542 = vunpack.c.l.b16 %v506
    %v543 = vunpack.c.l.b16 %v507
    %v544 = vunpack.c.l.b16 %v508
    %v545 = vunpack.c.l.b16 %v509
    %v546 = vunpack.c.l.b16 %v510
    %v547 = vunpack.c.l.b16 %v511
    %v548 = vunpack.c.l.b16 %v512
    %v549 = vunpack.c.l.b16 %v513
    %v550 = vunpack.c.l.b16 %v514
    %v551 = vunpack.c.l.b16 %v515
    %v552 = vunpack.c.l.b16 %v516
    %v553 = vunpack.c.l.b16 %v517
    %v554 = vunpack.c.l.b16 %v518
    %v555 = vpack.c.b16 %v540, %v539
    %v556 = vpack.c.b16 %v542, %v541
    %v557 = vpack.c.b16 %v544, %v543
    %v558 = vpack.c.b16 %v546, %v545
    %v559 = vpack.c.b16 %v548, %v547
    %v560 = vpack.c.b16 %v550, %v549
    %v561 = vpack.c.b16 %v552, %v551
    %v562 = vpack.c.b16 %v554, %v553
    %571 = vmatprep.subr.bf16.mxu0 0
    %572 = vmatpush1.bf16.msra.mxu0 %v555
    %573 = vmatprep.subr.bf16.mxu0 0
    %574 = vmatpush1.bf16.msra.mxu0 %v556
    %575 = vmatprep.subr.bf16.mxu0 0
    %576 = vmatpush1.bf16.msra.mxu0 %v557
    %577 = vmatprep.subr.bf16.mxu0 0
    %578 = vmatpush1.bf16.msra.mxu0 %v558
    %579 = vmatprep.subr.bf16.mxu0 0
    %580 = vmatpush1.bf16.msra.mxu0 %v559
    %581 = vmatprep.subr.bf16.mxu0 0
    %582 = vmatpush1.bf16.msra.mxu0 %v560
    %583 = vmatprep.subr.bf16.mxu0 0
    %584 = vmatpush1.bf16.msra.mxu0 %v561
    %585 = vmatprep.subr.bf16.mxu0 0
    %586 = vmatpush1.bf16.msra.mxu0 %v562
    %587 = vmatprep.subr.bf16.mxu0 0
    %588 = vmatpush1.bf16.msra.mxu0 0
    %589 = vmatprep.subr.bf16.mxu0 0
    %590 = vmatpush1.bf16.msra.mxu0 0
    %591 = vmatprep.subr.bf16.mxu0 0
    %592 = vmatpush1.bf16.msra.mxu0 0
    %593 = vmatprep.subr.bf16.mxu0 0
    %594 = vmatpush1.bf16.msra.mxu0 0
    %595 = vmatprep.subr.bf16.mxu0 0
    %596 = vmatpush1.bf16.msra.mxu0 0
    %597 = vmatprep.subr.bf16.mxu0 0
    %598 = vmatpush1.bf16.msra.mxu0 0
    %599 = vmatprep.subr.bf16.mxu0 0
    %600 = vmatpush1.bf16.msra.mxu0 0
    %601 = vmatprep.subr.bf16.mxu0 0
    %602 = vmatpush1.bf16.msra.mxu0 0
    %603 = vmatprep.mubr.bf16.mxu0 0
    %604 = vmatmul.mubr.bf16.gmra.mrb[0].mxu0 %v500
    %v605 = vpop.f32.mrb[0].mxu0
    %v606 = vadd.f32 %v522, %v605
    %v607 = vpop.f32.mrb[0].mxu0
    %v608 = vpop.f32.mrb[0].mxu0
    %v609 = vadd.f32 %v522, %v608
    %v610 = vpop.f32.mrb[0].mxu0
    %611 = vmatprep.mubr.bf16.mxu0 0
    %612 = vmatmul.mubr.bf16.gmra.mrb[0].mxu0 %v501
    %v613 = vpop.f32.mrb[0].mxu0
    %v614 = vadd.f32 %v522, %v613
    %v615 = vpop.f32.mrb[0].mxu0
    %v616 = vpop.f32.mrb[0].mxu0
    %v617 = vadd.f32 %v522, %v616
    %v618 = vpop.f32.mrb[0].mxu0
    %619 = vdwg.mxu0
    %v620 = vmax.f32 %v606, 0.0
    %v621 = vmax.f32 %v609, 0.0
    %v622 = vmax.f32 %v614, 0.0
    %v623 = vmax.f32 %v617, 0.0
    %v624 = vpack.c.bf16 %v621, %v620
    %v625 = vpack.c.bf16 %v623, %v622
    %vm626 = vcmp.ge.s32.totalorder %v72, 16
    %vm627 = vcmp.lt.s32.totalorder %v72, 32
    %vm628 = vmand %vm626, %vm627
    %vm629 = vmpackc.low %vm628, %vm628
    %v630 = vsel %vm629, 65537, 0
    %v631 = vlaneseq
    %v632 = vshrl.u32 %v631, 7
    %v633 = vsub.s32 0, %v632
    %v634 = vrot.slane %v630, %v633
    %vm635 = vcmp.ne.s16.totalorder %v634, 0
    %v636 = vsel %vm635, %v624, %v449
    %v637 = vsel %vm635, %v625, %v450
    %640 = vrot.lane.b32.xlu0 %v636, 16
    %v641 = vpop.permute.xlu0 %640
    %642 = vrot.lane.b32.xlu0 %v637, 16
    %v643 = vpop.permute.xlu0 %642
    %vm644 = vcmask 130048
    %v647 = vsel %vm644, %v274, %v641
    %v650 = vsel %vm644, %v275, %v643
    %vm651 = vcmask 392192
    %v653 = vsel %vm651, %v647, 0
    %v655 = vsel %vm651, %v650, 0
    %657 = vmatprep.subr.bf16.mxu0 0
    %658 = vmatpush1.bf16.msra.mxu0 %v653
    %659 = vmatprep.subr.bf16.mxu0 0
    %660 = vmatpush1.bf16.msra.mxu0 %v655
    %661 = vmatprep.subr.bf16.mxu0 0
    %662 = vmatpush1.bf16.msra.mxu0 0
    %663 = vmatprep.subr.bf16.mxu0 0
    %664 = vmatpush1.bf16.msra.mxu0 0
    %665 = vmatprep.subr.bf16.mxu0 0
    %666 = vmatpush1.bf16.msra.mxu0 0
    %667 = vmatprep.subr.bf16.mxu0 0
    %668 = vmatpush1.bf16.msra.mxu0 0
    %669 = vmatprep.subr.bf16.mxu0 0
    %670 = vmatpush1.bf16.msra.mxu0 0
    %671 = vmatprep.subr.bf16.mxu0 0
    %672 = vmatpush1.bf16.msra.mxu0 0
    %673 = vmatprep.subr.bf16.mxu0 0
    %674 = vmatpush1.bf16.msra.mxu0 0
    %675 = vmatprep.subr.bf16.mxu0 0
    %676 = vmatpush1.bf16.msra.mxu0 0
    %677 = vmatprep.subr.bf16.mxu0 0
    %678 = vmatpush1.bf16.msra.mxu0 0
    %679 = vmatprep.subr.bf16.mxu0 0
    %680 = vmatpush1.bf16.msra.mxu0 0
    %681 = vmatprep.subr.bf16.mxu0 0
    %682 = vmatpush1.bf16.msra.mxu0 0
    %683 = vmatprep.subr.bf16.mxu0 0
    %684 = vmatpush1.bf16.msra.mxu0 0
    %685 = vmatprep.subr.bf16.mxu0 0
    %686 = vmatpush1.bf16.msra.mxu0 0
    %687 = vmatprep.subr.bf16.mxu0 0
    %688 = vmatpush1.bf16.msra.mxu0 0
    %689 = vmatprep.mubr.bf16.mxu0 0
    %690 = vmatmul.mubr.bf16.gmra.mrb[0].mxu0 %v97
    %v691 = vpop.f32.mrb[0].mxu0
    %v692 = vadd.f32 0.0, %v691
    %v693 = vpop.f32.mrb[0].mxu0
    %v694 = vpop.f32.mrb[0].mxu0
    %v695 = vadd.f32 0.0, %v694
    %v696 = vpop.f32.mrb[0].mxu0
    %697 = vmatprep.mubr.bf16.mxu0 0
    %698 = vmatmul.mubr.bf16.gmra.mrb[0].mxu0 %v100
    %v699 = vpop.f32.mrb[0].mxu0
    %v700 = vadd.f32 0.0, %v699
    %v701 = vpop.f32.mrb[0].mxu0
    %v702 = vpop.f32.mrb[0].mxu0
    %v703 = vadd.f32 0.0, %v702
    %v704 = vpop.f32.mrb[0].mxu0
    %705 = vdwg.mxu0
    %v706 = vpack.c.bf16 %v695, %v692
    %v707 = vpack.c.bf16 %v703, %v700
    %s708 = scalar_lea.vmem [#allocation7], 192
    %v709 = vld [vmem:[%s708] sm:$0xf]
    %v710 = vld [vmem:[%s708 + $0x4] sm:$0xf]
    %v711 = vld [vmem:[%s708 + $0x8] sm:$0xf]
    %v712 = vld [vmem:[%s708 + $0xc] sm:$0xf]
    %v713 = vld [vmem:[%s708 + $0x10] sm:$0xf]
    %v714 = vld [vmem:[%s708 + $0x14] sm:$0xf]
    %v715 = vld [vmem:[%s708 + $0x18] sm:$0xf]
    %v716 = vld [vmem:[%s708 + $0x1c] sm:$0xf]
    %v717 = vld [vmem:[%s708 + $0x20] sm:$0xf]
    %v718 = vld [vmem:[%s708 + $0x24] sm:$0xf]
    %v719 = vld [vmem:[%s708 + $0x28] sm:$0xf]
    %v720 = vld [vmem:[%s708 + $0x2c] sm:$0xf]
    %v721 = vld [vmem:[%s708 + $0x30] sm:$0xf]
    %v722 = vld [vmem:[%s708 + $0x34] sm:$0xf]
    %v723 = vld [vmem:[%s708 + $0x38] sm:$0xf]
    %v724 = vld [vmem:[%s708 + $0x3c] sm:$0xf]
    %v725 = vlaneseq
    %v726 = vshrl.u32 %v725, 7
    %v727 = vsub.s32 3, %v726
    %v728 = vrot.slane %v70, %v727
    %v745 = vunpack.c.l.b16 %v709
    %v746 = vunpack.c.l.b16 %v710
    %v747 = vunpack.c.l.b16 %v711
    %v748 = vunpack.c.l.b16 %v712
    %v749 = vunpack.c.l.b16 %v713
    %v750 = vunpack.c.l.b16 %v714
    %v751 = vunpack.c.l.b16 %v715
    %v752 = vunpack.c.l.b16 %v716
    %v753 = vunpack.c.l.b16 %v717
    %v754 = vunpack.c.l.b16 %v718
    %v755 = vunpack.c.l.b16 %v719
    %v756 = vunpack.c.l.b16 %v720
    %v757 = vunpack.c.l.b16 %v721
    %v758 = vunpack.c.l.b16 %v722
    %v759 = vunpack.c.l.b16 %v723
    %v760 = vunpack.c.l.b16 %v724
    %v761 = vpack.c.b16 %v746, %v745
    %v762 = vpack.c.b16 %v748, %v747
    %v763 = vpack.c.b16 %v750, %v749
    %v764 = vpack.c.b16 %v752, %v751
    %v765 = vpack.c.b16 %v754, %v753
    %v766 = vpack.c.b16 %v756, %v755
    %v767 = vpack.c.b16 %v758, %v757
    %v768 = vpack.c.b16 %v760, %v759
    %777 = vmatprep.subr.bf16.mxu0 0
    %778 = vmatpush1.bf16.msra.mxu0 %v761
    %779 = vmatprep.subr.bf16.mxu0 0
    %780 = vmatpush1.bf16.msra.mxu0 %v762
    %781 = vmatprep.subr.bf16.mxu0 0
    %782 = vmatpush1.bf16.msra.mxu0 %v763
    %783 = vmatprep.subr.bf16.mxu0 0
    %784 = vmatpush1.bf16.msra.mxu0 %v764
    %785 = vmatprep.subr.bf16.mxu0 0
    %786 = vmatpush1.bf16.msra.mxu0 %v765
    %787 = vmatprep.subr.bf16.mxu0 0
    %788 = vmatpush1.bf16.msra.mxu0 %v766
    %789 = vmatprep.subr.bf16.mxu0 0
    %790 = vmatpush1.bf16.msra.mxu0 %v767
    %791 = vmatprep.subr.bf16.mxu0 0
    %792 = vmatpush1.bf16.msra.mxu0 %v768
    %793 = vmatprep.subr.bf16.mxu0 0
    %794 = vmatpush1.bf16.msra.mxu0 0
    %795 = vmatprep.subr.bf16.mxu0 0
    %796 = vmatpush1.bf16.msra.mxu0 0
    %797 = vmatprep.subr.bf16.mxu0 0
    %798 = vmatpush1.bf16.msra.mxu0 0
    %799 = vmatprep.subr.bf16.mxu0 0
    %800 = vmatpush1.bf16.msra.mxu0 0
    %801 = vmatprep.subr.bf16.mxu0 0
    %802 = vmatpush1.bf16.msra.mxu0 0
    %803 = vmatprep.subr.bf16.mxu0 0
    %804 = vmatpush1.bf16.msra.mxu0 0
    %805 = vmatprep.subr.bf16.mxu0 0
    %806 = vmatpush1.bf16.msra.mxu0 0
    %807 = vmatprep.subr.bf16.mxu0 0
    %808 = vmatpush1.bf16.msra.mxu0 0
    %809 = vmatprep.mubr.bf16.mxu0 0
    %810 = vmatmul.mubr.bf16.gmra.mrb[0].mxu0 %v706
    %v811 = vpop.f32.mrb[0].mxu0
    %v812 = vadd.f32 %v728, %v811
    %v813 = vpop.f32.mrb[0].mxu0
    %v814 = vpop.f32.mrb[0].mxu0
    %v815 = vadd.f32 %v728, %v814
    %v816 = vpop.f32.mrb[0].mxu0
    %817 = vmatprep.mubr.bf16.mxu0 0
    %818 = vmatmul.mubr.bf16.gmra.mrb[0].mxu0 %v707
    %v819 = vpop.f32.mrb[0].mxu0
    %v820 = vadd.f32 %v728, %v819
    %v821 = vpop.f32.mrb[0].mxu0
    %v822 = vpop.f32.mrb[0].mxu0
    %v823 = vadd.f32 %v728, %v822
    %v824 = vpop.f32.mrb[0].mxu0
    %825 = vdwg.mxu0
    %v826 = vmax.f32 %v812, 0.0
    %v827 = vmax.f32 %v815, 0.0
    %v828 = vmax.f32 %v820, 0.0
    %v829 = vmax.f32 %v823, 0.0
    %v830 = vpack.c.bf16 %v827, %v826
    %v831 = vpack.c.bf16 %v829, %v828
    %832 = vmatprep.subr.bf16.mxu0 0
    %833 = vmatpush1.bf16.msra.mxu0 %v830
    %834 = vmatprep.subr.bf16.mxu0 0
    %835 = vmatpush1.bf16.msra.mxu0 %v831
    %836 = vmatprep.subr.bf16.mxu0 0
    %837 = vmatpush1.bf16.msra.mxu0 0
    %838 = vmatprep.subr.bf16.mxu0 0
    %839 = vmatpush1.bf16.msra.mxu0 0
    %840 = vmatprep.subr.bf16.mxu0 0
    %841 = vmatpush1.bf16.msra.mxu0 0
    %842 = vmatprep.subr.bf16.mxu0 0
    %843 = vmatpush1.bf16.msra.mxu0 0
    %844 = vmatprep.subr.bf16.mxu0 0
    %845 = vmatpush1.bf16.msra.mxu0 0
    %846 = vmatprep.subr.bf16.mxu0 0
    %847 = vmatpush1.bf16.msra.mxu0 0
    %848 = vmatprep.subr.bf16.mxu0 0
    %849 = vmatpush1.bf16.msra.mxu0 0
    %850 = vmatprep.subr.bf16.mxu0 0
    %851 = vmatpush1.bf16.msra.mxu0 0
    %852 = vmatprep.subr.bf16.mxu0 0
    %853 = vmatpush1.bf16.msra.mxu0 0
    %854 = vmatprep.subr.bf16.mxu0 0
    %855 = vmatpush1.bf16.msra.mxu0 0
    %856 = vmatprep.subr.bf16.mxu0 0
    %857 = vmatpush1.bf16.msra.mxu0 0
    %858 = vmatprep.subr.bf16.mxu0 0
    %859 = vmatpush1.bf16.msra.mxu0 0
    %860 = vmatprep.subr.bf16.mxu0 0
    %861 = vmatpush1.bf16.msra.mxu0 0
    %862 = vmatprep.subr.bf16.mxu0 0
    %863 = vmatpush1.bf16.msra.mxu0 0
    %864 = vmatprep.mubr.bf16.mxu0 0
    %865 = vmatmul.mubr.bf16.gmra.mrb[0].mxu0 %v97
    %v866 = vpop.f32.mrb[0].mxu0
    %v867 = vadd.f32 0.0, %v866
    %v868 = vpop.f32.mrb[0].mxu0
    %v869 = vpop.f32.mrb[0].mxu0
    %v870 = vadd.f32 0.0, %v869
    %v871 = vpop.f32.mrb[0].mxu0
    %872 = vmatprep.mubr.bf16.mxu0 0
    %873 = vmatmul.mubr.bf16.gmra.mrb[0].mxu0 %v100
    %v874 = vpop.f32.mrb[0].mxu0
    %v875 = vadd.f32 0.0, %v874
    %v876 = vpop.f32.mrb[0].mxu0
    %v877 = vpop.f32.mrb[0].mxu0
    %v878 = vadd.f32 0.0, %v877
    %v879 = vpop.f32.mrb[0].mxu0
    %880 = vdwg.mxu0
    %v881 = vpack.c.bf16 %v870, %v867
    %v882 = vpack.c.bf16 %v878, %v875
    %s883 = scalar_lea.vmem [#allocation7], 256
    %v884 = vld [vmem:[%s883] sm:$0xf]
    %v885 = vld [vmem:[%s883 + $0x4] sm:$0xf]
    %v886 = vld [vmem:[%s883 + $0x8] sm:$0xf]
    %v887 = vld [vmem:[%s883 + $0xc] sm:$0xf]
    %v888 = vld [vmem:[%s883 + $0x10] sm:$0xf]
    %v889 = vld [vmem:[%s883 + $0x14] sm:$0xf]
    %v890 = vld [vmem:[%s883 + $0x18] sm:$0xf]
    %v891 = vld [vmem:[%s883 + $0x1c] sm:$0xf]
    %v892 = vld [vmem:[%s883 + $0x20] sm:$0xf]
    %v893 = vld [vmem:[%s883 + $0x24] sm:$0xf]
    %v894 = vld [vmem:[%s883 + $0x28] sm:$0xf]
    %v895 = vld [vmem:[%s883 + $0x2c] sm:$0xf]
    %v896 = vld [vmem:[%s883 + $0x30] sm:$0xf]
    %v897 = vld [vmem:[%s883 + $0x34] sm:$0xf]
    %v898 = vld [vmem:[%s883 + $0x38] sm:$0xf]
    %v899 = vld [vmem:[%s883 + $0x3c] sm:$0xf]
    %v900 = vlaneseq
    %v901 = vshrl.u32 %v900, 7
    %v902 = vsub.s32 4, %v901
    %v903 = vrot.slane %v70, %v902
    %v920 = vunpack.c.l.b16 %v884
    %v921 = vunpack.c.l.b16 %v885
    %v922 = vunpack.c.l.b16 %v886
    %v923 = vunpack.c.l.b16 %v887
    %v924 = vunpack.c.l.b16 %v888
    %v925 = vunpack.c.l.b16 %v889
    %v926 = vunpack.c.l.b16 %v890
    %v927 = vunpack.c.l.b16 %v891
    %v928 = vunpack.c.l.b16 %v892
    %v929 = vunpack.c.l.b16 %v893
    %v930 = vunpack.c.l.b16 %v894
    %v931 = vunpack.c.l.b16 %v895
    %v932 = vunpack.c.l.b16 %v896
    %v933 = vunpack.c.l.b16 %v897
    %v934 = vunpack.c.l.b16 %v898
    %v935 = vunpack.c.l.b16 %v899
    %v936 = vpack.c.b16 %v921, %v920
    %v937 = vpack.c.b16 %v923, %v922
    %v938 = vpack.c.b16 %v925, %v924
    %v939 = vpack.c.b16 %v927, %v926
    %v940 = vpack.c.b16 %v929, %v928
    %v941 = vpack.c.b16 %v931, %v930
    %v942 = vpack.c.b16 %v933, %v932
    %v943 = vpack.c.b16 %v935, %v934
    %952 = vmatprep.subr.bf16.mxu0 0
    %953 = vmatpush1.bf16.msra.mxu0 %v936
    %954 = vmatprep.subr.bf16.mxu0 0
    %955 = vmatpush1.bf16.msra.mxu0 %v937
    %956 = vmatprep.subr.bf16.mxu0 0
    %957 = vmatpush1.bf16.msra.mxu0 %v938
    %958 = vmatprep.subr.bf16.mxu0 0
    %959 = vmatpush1.bf16.msra.mxu0 %v939
    %960 = vmatprep.subr.bf16.mxu0 0
    %961 = vmatpush1.bf16.msra.mxu0 %v940
    %962 = vmatprep.subr.bf16.mxu0 0
    %963 = vmatpush1.bf16.msra.mxu0 %v941
    %964 = vmatprep.subr.bf16.mxu0 0
    %965 = vmatpush1.bf16.msra.mxu0 %v942
    %966 = vmatprep.subr.bf16.mxu0 0
    %967 = vmatpush1.bf16.msra.mxu0 %v943
    %968 = vmatprep.subr.bf16.mxu0 0
    %969 = vmatpush1.bf16.msra.mxu0 0
    %970 = vmatprep.subr.bf16.mxu0 0
    %971 = vmatpush1.bf16.msra.mxu0 0
    %972 = vmatprep.subr.bf16.mxu0 0
    %973 = vmatpush1.bf16.msra.mxu0 0
    %974 = vmatprep.subr.bf16.mxu0 0
    %975 = vmatpush1.bf16.msra.mxu0 0
    %976 = vmatprep.subr.bf16.mxu0 0
    %977 = vmatpush1.bf16.msra.mxu0 0
    %978 = vmatprep.subr.bf16.mxu0 0
    %979 = vmatpush1.bf16.msra.mxu0 0
    %980 = vmatprep.subr.bf16.mxu0 0
    %981 = vmatpush1.bf16.msra.mxu0 0
    %982 = vmatprep.subr.bf16.mxu0 0
    %983 = vmatpush1.bf16.msra.mxu0 0
    %984 = vmatprep.mubr.bf16.mxu0 0
    %985 = vmatmul.mubr.bf16.gmra.mrb[0].mxu0 %v881
    %v986 = vpop.f32.mrb[0].mxu0
    %v987 = vadd.f32 %v903, %v986
    %v988 = vpop.f32.mrb[0].mxu0
    %v989 = vpop.f32.mrb[0].mxu0
    %v990 = vadd.f32 %v903, %v989
    %v991 = vpop.f32.mrb[0].mxu0
    %992 = vmatprep.mubr.bf16.mxu0 0
    %993 = vmatmul.mubr.bf16.gmra.mrb[0].mxu0 %v882
    %v994 = vpop.f32.mrb[0].mxu0
    %v995 = vadd.f32 %v903, %v994
    %v996 = vpop.f32.mrb[0].mxu0
    %v997 = vpop.f32.mrb[0].mxu0
    %v998 = vadd.f32 %v903, %v997
    %v999 = vpop.f32.mrb[0].mxu0
    %1000 = vdwg.mxu0
    %v1001 = vmax.f32 %v987, 0.0
    %v1002 = vmax.f32 %v990, 0.0
    %v1003 = vmax.f32 %v995, 0.0
    %v1004 = vmax.f32 %v998, 0.0
    %v1005 = vpack.c.bf16 %v1002, %v1001
    %v1006 = vpack.c.bf16 %v1004, %v1003
    %v1007 = vsel %vm635, %v1005, %v830
    %v1008 = vsel %vm635, %v1006, %v831
    %1011 = vrot.lane.b32.xlu0 %v1007, 48
    %v1012 = vpop.permute.xlu0 %1011
    %1013 = vrot.lane.b32.xlu0 %v1008, 48
    %v1014 = vpop.permute.xlu0 %1013
    %v1016 = vsel %vm651, %v653, %v1012
    %v1018 = vsel %vm651, %v655, %v1014
    %vm1019 = vcmask 654336
    %v1020 = vsel %vm1019, %v1016, 0
    %v1022 = vsel %vm1019, %v1018, 0
    %1024 = vmatprep.subr.bf16.mxu0 0
    %1025 = vmatpush1.bf16.msra.mxu0 %v1020
    %1026 = vmatprep.subr.bf16.mxu0 0
    %1027 = vmatpush1.bf16.msra.mxu0 %v1022
    %1028 = vmatprep.subr.bf16.mxu0 0
    %1029 = vmatpush1.bf16.msra.mxu0 0
    %1030 = vmatprep.subr.bf16.mxu0 0
    %1031 = vmatpush1.bf16.msra.mxu0 0
    %1032 = vmatprep.subr.bf16.mxu0 0
    %1033 = vmatpush1.bf16.msra.mxu0 0
    %1034 = vmatprep.subr.bf16.mxu0 0
    %1035 = vmatpush1.bf16.msra.mxu0 0
    %1036 = vmatprep.subr.bf16.mxu0 0
    %1037 = vmatpush1.bf16.msra.mxu0 0
    %1038 = vmatprep.subr.bf16.mxu0 0
    %1039 = vmatpush1.bf16.msra.mxu0 0
    %1040 = vmatprep.subr.bf16.mxu0 0
    %1041 = vmatpush1.bf16.msra.mxu0 0
    %1042 = vmatprep.subr.bf16.mxu0 0
    %1043 = vmatpush1.bf16.msra.mxu0 0
    %1044 = vmatprep.subr.bf16.mxu0 0
    %1045 = vmatpush1.bf16.msra.mxu0 0
    %1046 = vmatprep.subr.bf16.mxu0 0
    %1047 = vmatpush1.bf16.msra.mxu0 0
    %1048 = vmatprep.subr.bf16.mxu0 0
    %1049 = vmatpush1.bf16.msra.mxu0 0
    %1050 = vmatprep.subr.bf16.mxu0 0
    %1051 = vmatpush1.bf16.msra.mxu0 0
    %1052 = vmatprep.subr.bf16.mxu0 0
    %1053 = vmatpush1.bf16.msra.mxu0 0
    %1054 = vmatprep.subr.bf16.mxu0 0
    %1055 = vmatpush1.bf16.msra.mxu0 0
    %1056 = vmatprep.mubr.bf16.mxu0 0
    %1057 = vmatmul.mubr.bf16.gmra.mrb[0].mxu0 %v97
    %v1058 = vpop.f32.mrb[0].mxu0
    %v1059 = vadd.f32 0.0, %v1058
    %v1060 = vpop.f32.mrb[0].mxu0
    %v1061 = vpop.f32.mrb[0].mxu0
    %v1062 = vadd.f32 0.0, %v1061
    %v1063 = vpop.f32.mrb[0].mxu0
    %1064 = vmatprep.mubr.bf16.mxu0 0
    %1065 = vmatmul.mubr.bf16.gmra.mrb[0].mxu0 %v100
    %v1066 = vpop.f32.mrb[0].mxu0
    %v1067 = vadd.f32 0.0, %v1066
    %v1068 = vpop.f32.mrb[0].mxu0
    %v1069 = vpop.f32.mrb[0].mxu0
    %v1070 = vadd.f32 0.0, %v1069
    %v1071 = vpop.f32.mrb[0].mxu0
    %1072 = vdwg.mxu0
    %v1073 = vpack.c.bf16 %v1062, %v1059
    %v1074 = vpack.c.bf16 %v1070, %v1067
    %s1075 = scalar_lea.vmem [#allocation7], 320
    %v1076 = vld [vmem:[%s1075] sm:$0xf]
    %v1077 = vld [vmem:[%s1075 + $0x4] sm:$0xf]
    %v1078 = vld [vmem:[%s1075 + $0x8] sm:$0xf]
    %v1079 = vld [vmem:[%s1075 + $0xc] sm:$0xf]
    %v1080 = vld [vmem:[%s1075 + $0x10] sm:$0xf]
    %v1081 = vld [vmem:[%s1075 + $0x14] sm:$0xf]
    %v1082 = vld [vmem:[%s1075 + $0x18] sm:$0xf]
    %v1083 = vld [vmem:[%s1075 + $0x1c] sm:$0xf]
    %v1084 = vld [vmem:[%s1075 + $0x20] sm:$0xf]
    %v1085 = vld [vmem:[%s1075 + $0x24] sm:$0xf]
    %v1086 = vld [vmem:[%s1075 + $0x28] sm:$0xf]
    %v1087 = vld [vmem:[%s1075 + $0x2c] sm:$0xf]
    %v1088 = vld [vmem:[%s1075 + $0x30] sm:$0xf]
    %v1089 = vld [vmem:[%s1075 + $0x34] sm:$0xf]
    %v1090 = vld [vmem:[%s1075 + $0x38] sm:$0xf]
    %v1091 = vld [vmem:[%s1075 + $0x3c] sm:$0xf]
    %v1092 = vlaneseq
    %v1093 = vshrl.u32 %v1092, 7
    %v1094 = vsub.s32 5, %v1093
    %v1095 = vrot.slane %v70, %v1094
    %v1112 = vunpack.c.l.b16 %v1076
    %v1113 = vunpack.c.l.b16 %v1077
    %v1114 = vunpack.c.l.b16 %v1078
    %v1115 = vunpack.c.l.b16 %v1079
    %v1116 = vunpack.c.l.b16 %v1080
    %v1117 = vunpack.c.l.b16 %v1081
    %v1118 = vunpack.c.l.b16 %v1082
    %v1119 = vunpack.c.l.b16 %v1083
    %v1120 = vunpack.c.l.b16 %v1084
    %v1121 = vunpack.c.l.b16 %v1085
    %v1122 = vunpack.c.l.b16 %v1086
    %v1123 = vunpack.c.l.b16 %v1087
    %v1124 = vunpack.c.l.b16 %v1088
    %v1125 = vunpack.c.l.b16 %v1089
    %v1126 = vunpack.c.l.b16 %v1090
    %v1127 = vunpack.c.l.b16 %v1091
    %v1128 = vpack.c.b16 %v1113, %v1112
    %v1129 = vpack.c.b16 %v1115, %v1114
    %v1130 = vpack.c.b16 %v1117, %v1116
    %v1131 = vpack.c.b16 %v1119, %v1118
    %v1132 = vpack.c.b16 %v1121, %v1120
    %v1133 = vpack.c.b16 %v1123, %v1122
    %v1134 = vpack.c.b16 %v1125, %v1124
    %v1135 = vpack.c.b16 %v1127, %v1126
    %1144 = vmatprep.subr.bf16.mxu0 0
    %1145 = vmatpush1.bf16.msra.mxu0 %v1128
    %1146 = vmatprep.subr.bf16.mxu0 0
    %1147 = vmatpush1.bf16.msra.mxu0 %v1129
    %1148 = vmatprep.subr.bf16.mxu0 0
    %1149 = vmatpush1.bf16.msra.mxu0 %v1130
    %1150 = vmatprep.subr.bf16.mxu0 0
    %1151 = vmatpush1.bf16.msra.mxu0 %v1131
    %1152 = vmatprep.subr.bf16.mxu0 0
    %1153 = vmatpush1.bf16.msra.mxu0 %v1132
    %1154 = vmatprep.subr.bf16.mxu0 0
    %1155 = vmatpush1.bf16.msra.mxu0 %v1133
    %1156 = vmatprep.subr.bf16.mxu0 0
    %1157 = vmatpush1.bf16.msra.mxu0 %v1134
    %1158 = vmatprep.subr.bf16.mxu0 0
    %1159 = vmatpush1.bf16.msra.mxu0 %v1135
    %1160 = vmatprep.subr.bf16.mxu0 0
    %1161 = vmatpush1.bf16.msra.mxu0 0
    %1162 = vmatprep.subr.bf16.mxu0 0
    %1163 = vmatpush1.bf16.msra.mxu0 0
    %1164 = vmatprep.subr.bf16.mxu0 0
    %1165 = vmatpush1.bf16.msra.mxu0 0
    %1166 = vmatprep.subr.bf16.mxu0 0
    %1167 = vmatpush1.bf16.msra.mxu0 0
    %1168 = vmatprep.subr.bf16.mxu0 0
    %1169 = vmatpush1.bf16.msra.mxu0 0
    %1170 = vmatprep.subr.bf16.mxu0 0
    %1171 = vmatpush1.bf16.msra.mxu0 0
    %1172 = vmatprep.subr.bf16.mxu0 0
    %1173 = vmatpush1.bf16.msra.mxu0 0
    %1174 = vmatprep.subr.bf16.mxu0 0
    %1175 = vmatpush1.bf16.msra.mxu0 0
    %1176 = vmatprep.mubr.bf16.mxu0 0
    %1177 = vmatmul.mubr.bf16.gmra.mrb[0].mxu0 %v1073
    %v1178 = vpop.f32.mrb[0].mxu0
    %v1179 = vadd.f32 %v1095, %v1178
    %v1180 = vpop.f32.mrb[0].mxu0
    %v1181 = vpop.f32.mrb[0].mxu0
    %v1182 = vadd.f32 %v1095, %v1181
    %v1183 = vpop.f32.mrb[0].mxu0
    %1184 = vmatprep.mubr.bf16.mxu0 0
    %1185 = vmatmul.mubr.bf16.gmra.mrb[0].mxu0 %v1074
    %v1186 = vpop.f32.mrb[0].mxu0
    %v1187 = vadd.f32 %v1095, %v1186
    %v1188 = vpop.f32.mrb[0].mxu0
    %v1189 = vpop.f32.mrb[0].mxu0
    %v1190 = vadd.f32 %v1095, %v1189
    %v1191 = vpop.f32.mrb[0].mxu0
    %1192 = vdwg.mxu0
    %vm1193 = vcmp.lt.s32.totalorder %v72, 4
    %v1194 = vsel %vm1193, %v1179, -1e+30
    %v1195 = vsel %vm1193, %v1182, -1e+30
    %v1196 = vsel %vm1193, %v1187, -1e+30
    %v1197 = vsel %vm1193, %v1190, -1e+30
    %1198 = vmax.xlane.f32.xlu0 %v1194
    %v1199 = vpop.xlane.xlu0 %1198
    %1200 = vmax.xlane.f32.xlu0 %v1195
    %v1201 = vpop.xlane.xlu0 %1200
    %1202 = vmax.xlane.f32.xlu0 %v1196
    %v1203 = vpop.xlane.xlu0 %1202
    %1204 = vmax.xlane.f32.xlu0 %v1197
    %v1205 = vpop.xlane.xlu0 %1204
    %v1206 = vsub.f32 %v1194, %v1199
    %v1207 = vsub.f32 %v1195, %v1201
    %v1208 = vsub.f32 %v1196, %v1203
    %v1209 = vsub.f32 %v1197, %v1205
    %v1210 = vmul.f32 %v1206, 1.442695
    %v1211 = vpow.pop %v1210
    %v1212 = vmul.f32 %v1207, 1.442695
    %v1213 = vpow.pop %v1212
    %v1214 = vmul.f32 %v1208, 1.442695
    %v1215 = vpow.pop %v1214
    %v1216 = vmul.f32 %v1209, 1.442695
    %v1217 = vpow.pop %v1216
    %1218 = vadd.xlane.f32.xlu0 %v1211
    %v1219 = vpop.xlane.xlu0 %1218
    %1220 = vadd.xlane.f32.xlu0 %v1213
    %v1221 = vpop.xlane.xlu0 %1220
    %1222 = vadd.xlane.f32.xlu0 %v1215
    %v1223 = vpop.xlane.xlu0 %1222
    %1224 = vadd.xlane.f32.xlu0 %v1217
    %v1225 = vpop.xlane.xlu0 %1224
    %v1226 = vlog2.pop %v1219
    %v1227 = vmul.f32 %v1226, 0.6931472
    %v1228 = vlog2.pop %v1221
    %v1229 = vmul.f32 %v1228, 0.6931472
    %v1230 = vlog2.pop %v1223
    %v1231 = vmul.f32 %v1230, 0.6931472
    %v1232 = vlog2.pop %v1225
    %v1233 = vmul.f32 %v1232, 0.6931472
    %v1234 = vsub.f32 %v1206, %v1227
    %v1235 = vsub.f32 %v1207, %v1229
    %v1236 = vsub.f32 %v1208, %v1231
    %v1237 = vsub.f32 %v1209, %v1233
    %1238 = vst [vmem:[#allocation8] sm:$0xff] %v1234
    %1239 = vst [vmem:[#allocation8 + $0x8] sm:$0xff] %v1235
    %1240 = vst [vmem:[#allocation8 + $0x10] sm:$0xff] %v1236
    %1241 = vst [vmem:[#allocation8 + $0x18] sm:$0xff] %v1237
    // Predicated region
    $region30: #{tpu_custom_call.1} parent=1 // pred_check
      _
    $region31: #{tpu_custom_call.1} parent=1 // pred_check_branch
      %1243 = sbr.rel (0) target = $region33
    $region32: #{tpu_custom_call.1} parent=1 // pred_region
      %s1245 = ssub.s32 512, 512
      %1246 = vsyncadd [#allocation4], %s1245
      %s1247 = sshll.u32 [#allocation8], 4
      %s1248 = int_to_ptr.vmem [resolvable:$true] %s1247
      %1253 = dma.vmem_to_hbm [thread:$0]  %s1248, 512, %s4, [#allocation4], 128, 128, 8
    $region33: #{tpu_custom_call.1} parent=1 // pred_fallthru
      _
    // Predicated region
    $region34: #{tpu_custom_call.1} parent=1 // pred_check
      _
    $region35: #{tpu_custom_call.1} parent=1 // pred_check_branch
      %1255 = sbr.rel (0) target = $region37
    $region36: #{tpu_custom_call.1} parent=1 // pred_region
      %1256 = dma.done [#allocation4], 512
    $region37: #{tpu_custom_call.1} parent=1 // pred_fallthru
      _
    %1257 = vsyncpa [#allocation3], 1
    %1258 = vsyncpa [#allocation6], 1
    %1259 = vsyncpa [#allocation4], 1

</llo_original>
